<compile_context>
chip_gen: v7x
topology: tpu7x:2x2x1
jax: 0.10.0
libtpu: 0.0.40
codegen_flags: <defaults>
</compile_context>

<pallas_src>
import functools

import jax
import jax.numpy as jnp
from jax.experimental import pallas as pl
from jax.experimental.pallas import tpu as pltpu


def _round_up(x: int, m: int) -> int:
    return ((x + m - 1) // m) * m


def _waveform_kernel(x_ref, o_ref, *, T_in: int, inv_C: float):
    """Fused mono-mix + clamp + trim/pad for one (block_B, block_T) output tile.

    x_ref: (block_B, C, block_T) input tile (time on the lane axis)
    o_ref: (block_B, block_T)    output tile
    """
    block_B, C, block_T = x_ref.shape
    t = pl.program_id(1)
    tile_start = t * block_T

    @pl.when(tile_start < T_in)
    def _compute():
        # Unrolled channel sum on dense (block_B, block_T) slabs (pure VPU, f32 accum),
        # then one multiply by the precomputed reciprocal instead of a divide.
        acc = x_ref[:, 0, :].astype(jnp.float32)
        for c in range(1, C):
            acc = acc + x_ref[:, c, :].astype(jnp.float32)
        mono = jnp.clip(acc * inv_C, -1.0, 1.0)
        # Zero the padded tail of a tile that straddles the end of the input
        # (also discards any garbage from the partial out-of-bounds DMA region).
        col = tile_start + jax.lax.broadcasted_iota(jnp.int32, (block_B, block_T), 1)
        mono = jnp.where(col < T_in, mono, 0.0)
        o_ref[...] = mono.astype(o_ref.dtype)

    @pl.when(tile_start >= T_in)
    def _pad():
        # Pure-pad tile: no input needed, just store zeros.
        o_ref[...] = jnp.zeros_like(o_ref)


def waveform_pipeline(waveform: jax.Array, fixed_length: int) -> jax.Array:
    """(B, C, T) -> (B, 1, fixed_length): mono mix, clamp to [-1, 1], trim or zero-pad."""
    B, C, T = waveform.shape
    L = int(fixed_length)
    itemsize = jnp.dtype(waveform.dtype).itemsize

    # ---- tile selection --------------------------------------------------
    block_B = B if B < 8 else 8            # sublane dim: full B (small) or a multiple of 8
    # Lane tile: multiple of 128, big enough to approach the HBM roofline (>=512 ideal),
    # small enough that the double-buffered in+out footprint stays far under the 16 MiB
    # v5e scoped-VMEM default (and trivially under v7x's 64 MiB physical VMEM).
    budget_bytes = 2 * 1024 * 1024         # per input block
    bytes_per_col = max(block_B * C * itemsize, 1)
    max_bt_budget = max(128, (budget_bytes // bytes_per_col) // 128 * 128)
    block_T = min(2048, max_bt_budget, _round_up(L, 128))

    grid = (pl.cdiv(B, block_B), pl.cdiv(L, block_T))
    in_t_blocks = pl.cdiv(T, block_T)      # number of addressable input time blocks

    kernel = functools.partial(_waveform_kernel, T_in=T, inv_C=1.0 / C)

    cost = pl.CostEstimate(
        flops=B * L * (C + 2),
        transcendentals=0,
        bytes_accessed=itemsize * (B * C * min(T, L) + B * L),
    )

    out = pl.pallas_call(
        kernel,
        out_shape=jax.ShapeDtypeStruct((B, L), waveform.dtype),
        grid=grid,
        in_specs=[
            pl.BlockSpec(
                (block_B, C, block_T),
                # Only address input time blocks that exist: trim never reads past ~L,
                # and pure-pad tiles are clamped to the last valid block (consecutive
                # revisits skip the re-fetch; the kernel never reads them anyway).
                lambda b, t: (b, 0, jnp.minimum(t, in_t_blocks - 1)),
            )
        ],
        out_specs=pl.BlockSpec((block_B, block_T), lambda b, t: (b, t)),
        compiler_params=pltpu.CompilerParams(
            dimension_semantics=("parallel", "parallel"),
        ),
        cost_estimate=cost,
    )(waveform)

    # Keep a singleton mono-channel dim, matching torch "[B, 1, L]" convention.
    return out[:, None, :]


def _reference(waveform: jax.Array, fixed_length: int) -> jax.Array:
    """Pure-JAX reference of the PyTorch pipeline for correctness checking."""
    mono = jnp.mean(waveform, axis=1, keepdims=True)          # ToMono
    mono = jnp.clip(mono, -1.0, 1.0)                          # Clamp.one()
    B, _, T = mono.shape
    if T >= fixed_length:                                     # TrimOrPad
        return mono[:, :, :fixed_length]
    return jnp.pad(mono, ((0, 0), (0, 0), (0, fixed_length - T)))


if __name__ == "__main__":
    key = jax.random.PRNGKey(0)

    # Small deterministic example: batch=2, channels=4, samples=16.
    B, C, T = 2, 4, 16
    # Scale > 1 so the clamp actually triggers on some samples.
    x = 2.0 * jax.random.normal(key, (B, C, T), dtype=jnp.float32)

    # Pad path (fixed_length > T).
    out_pad = jax.block_until_ready(waveform_pipeline(x, 24))
    assert out_pad.shape == (B, 1, 24), out_pad.shape
    assert jnp.allclose(out_pad, _reference(x, 24), atol=1e-6, rtol=1e-6), "pad path mismatch"

    # Trim path (fixed_length < T).
    out_trim = jax.block_until_ready(waveform_pipeline(x, 12))
    assert jnp.allclose(out_trim, _reference(x, 12), atol=1e-6, rtol=1e-6), "trim path mismatch"

    # Multi-tile path: several time tiles including a pure-pad tile beyond T.
    B2, C2, T2, L2 = 4, 2, 1000, 3000
    x2 = 2.0 * jax.random.normal(jax.random.PRNGKey(0), (B2, C2, T2), dtype=jnp.float32)
    out2 = jax.block_until_ready(waveform_pipeline(x2, L2))
    assert out2.shape == (B2, 1, L2), out2.shape
    assert jnp.allclose(out2, _reference(x2, L2), atol=1e-6, rtol=1e-6), "multi-tile mismatch"

    print("KERNEL_OK")
</pallas_src>

<mosaic_0001>
module attributes {stable_mosaic.version = 11 : i64} {
  func.func @_waveform_kernel(%arg0: i32, %arg1: i32, %arg2: memref<2x4x128xf32, #tpu.memory_space<vmem>>, %arg3: memref<2x128xf32, #tpu.memory_space<vmem>>) attributes {dimension_semantics = [#tpu.dimension_semantics<parallel>, #tpu.dimension_semantics<parallel>], iteration_bounds = array<i64: 1, 1>, scalar_prefetch = 0 : i64, scratch_operands = 0 : i64, tpu.core_type = #tpu.core_type<tc>, window_params = [{transform_indices = @transform_0, window_bounds = array<i64: 2, 4, 128>}, {transform_indices = @transform_1, window_bounds = array<i64: 2, 128>}]} {
    %c128_i32 = arith.constant 128 : i32
    %0 = arith.muli %arg1, %c128_i32 : i32
    %c16_i32 = arith.constant 16 : i32
    %1 = arith.cmpi slt, %0, %c16_i32 : i32
    %2 = arith.extui %1 : i1 to i32
    %c0_i32 = arith.constant 0 : i32
    %3 = arith.cmpi ne, %2, %c0_i32 : i32
    scf.if %3 {
      %c0 = arith.constant 0 : index
      %c0_2 = arith.constant 0 : index
      %c0_3 = arith.constant 0 : index
      %7 = vector.load %arg2[%c0, %c0_2, %c0_3] : memref<2x4x128xf32, #tpu.memory_space<vmem>>, vector<2x1x128xf32>
      %8 = vector.shape_cast %7 : vector<2x1x128xf32> to vector<2x128xf32>
      %c0_4 = arith.constant 0 : index
      %c1 = arith.constant 1 : index
      %c0_5 = arith.constant 0 : index
      %9 = vector.load %arg2[%c0_4, %c1, %c0_5] : memref<2x4x128xf32, #tpu.memory_space<vmem>>, vector<2x1x128xf32>
      %10 = vector.shape_cast %9 : vector<2x1x128xf32> to vector<2x128xf32>
      %11 = arith.addf %8, %10 : vector<2x128xf32>
      %c0_6 = arith.constant 0 : index
      %c2 = arith.constant 2 : index
      %c0_7 = arith.constant 0 : index
      %12 = vector.load %arg2[%c0_6, %c2, %c0_7] : memref<2x4x128xf32, #tpu.memory_space<vmem>>, vector<2x1x128xf32>
      %13 = vector.shape_cast %12 : vector<2x1x128xf32> to vector<2x128xf32>
      %14 = arith.addf %11, %13 : vector<2x128xf32>
      %c0_8 = arith.constant 0 : index
      %c3 = arith.constant 3 : index
      %c0_9 = arith.constant 0 : index
      %15 = vector.load %arg2[%c0_8, %c3, %c0_9] : memref<2x4x128xf32, #tpu.memory_space<vmem>>, vector<2x1x128xf32>
      %16 = vector.shape_cast %15 : vector<2x1x128xf32> to vector<2x128xf32>
      %17 = arith.addf %14, %16 : vector<2x128xf32>
      %cst = arith.constant 2.500000e-01 : f32
      %18 = vector.broadcast %cst : f32 to vector<2x128xf32>
      %19 = arith.mulf %17, %18 : vector<2x128xf32>
      %cst_10 = arith.constant -1.000000e+00 : f32
      %cst_11 = arith.constant 1.000000e+00 : f32
      %20 = vector.broadcast %cst_10 : f32 to vector<2x128xf32>
      %21 = arith.maximumf %20, %19 : vector<2x128xf32>
      %22 = vector.broadcast %cst_11 : f32 to vector<2x128xf32>
      %23 = arith.minimumf %22, %21 : vector<2x128xf32>
      %24 = tpu.iota {dimensions = array<i32: 1>} : vector<2x128xi32>
      %25 = vector.broadcast %0 : i32 to vector<2x128xi32>
      %26 = arith.addi %25, %24 : vector<2x128xi32>
      %c16_i32_12 = arith.constant 16 : i32
      %27 = vector.broadcast %c16_i32_12 : i32 to vector<2x128xi32>
      %28 = arith.cmpi slt, %26, %27 : vector<2x128xi32>
      %cst_13 = arith.constant 0.000000e+00 : f32
      %29 = vector.broadcast %cst_13 : f32 to vector<2x128xf32>
      %30 = arith.select %28, %23, %29 : vector<2x128xi1>, vector<2x128xf32>
      %c0_14 = arith.constant 0 : index
      %c0_15 = arith.constant 0 : index
      %31 = vector.load %arg3[%c0_14, %c0_15] : memref<2x128xf32, #tpu.memory_space<vmem>>, vector<2x128xf32>
      tpu.vector_store %arg3[%c0_14, %c0_15], %30 {strides = array<i32>} : memref<2x128xf32, #tpu.memory_space<vmem>>, vector<2x128xf32>,
    } else {
    }
    %c16_i32_0 = arith.constant 16 : i32
    %4 = arith.cmpi sge, %0, %c16_i32_0 : i32
    %5 = arith.extui %4 : i1 to i32
    %c0_i32_1 = arith.constant 0 : i32
    %6 = arith.cmpi ne, %5, %c0_i32_1 : i32
    scf.if %6 {
      %cst = arith.constant 0.000000e+00 : f32
      %7 = vector.broadcast %cst : f32 to vector<2x128xf32>
      %c0 = arith.constant 0 : index
      %c0_2 = arith.constant 0 : index
      %8 = vector.load %arg3[%c0, %c0_2] : memref<2x128xf32, #tpu.memory_space<vmem>>, vector<2x128xf32>
      tpu.vector_store %arg3[%c0, %c0_2], %7 {strides = array<i32>} : memref<2x128xf32, #tpu.memory_space<vmem>>, vector<2x128xf32>,
    } else {
    }
    return
  }
  func.func @transform_0(%arg0: i32, %arg1: i32) -> (i32, i32, i32) {
    %c0_i32 = arith.constant 0 : i32
    %0 = arith.minsi %arg1, %c0_i32 : i32
    %c0_i32_0 = arith.constant 0 : i32
    %c0_i32_1 = arith.constant 0 : i32
    return %arg0, %c0_i32_0, %0 : i32, i32, i32
  }
  func.func @transform_1(%arg0: i32, %arg1: i32) -> (i32, i32) {
    %c0_i32 = arith.constant 0 : i32
    return %arg0, %arg1 : i32, i32
  }
}

</mosaic_0001>

<llo_original>
// kernel: tpu_custom_call.1
$region0: #{tpu_custom_call.1}
  #allocation0 [shape = 'u32[]', space=smem, size = 0x4, offset = 0x4, fixed_abs, tag = 'smem constant byte address 0x4 - core index']
  #allocation1 [shape = 'u32[144,128]{1,0:T(1,128)}', space=vmem, size = 0x12000, scoped, tag = 'internal scratch']
  %s0 = inlined_call_operand.hbm [shape: f32[2,4,16], index: 0, kind: input, shape index: {}]
  %s1 = inlined_call_operand.hbm [shape: f32[2,24], index: 1, kind: output, shape index: {}]
  %s2 = sld [smem:[#allocation0]]
  $region26: #{tpu_custom_call.1} parent=0
    _
  %s4 = ssub.s32 1, %s2
  %s5 = scalar_select 0, %s4, %s2
  $region1: #{tpu_custom_call.1} parent=0
    #allocation2 [shape = 'u8[4096]{0}', space=vmem, size = 0x1000, scoped, tag = 'input window, operand 0, single buffered']
    #allocation3 [shape = 's32[1]{0}', space=sflag, size = 0x4, scoped, tag = 'scoped memory for tpu_custom_call.1']
    #allocation4 [shape = 's32[1]{0}', space=sflag, size = 0x4, scoped, tag = 'scoped memory for tpu_custom_call.1']
    #allocation5 [shape = 'u8[1024]{0}', space=vmem, size = 0x400, scoped, tag = 'output window, operand 0, single buffered']
    %6 = vsyncpa [#allocation3], 0
    %7 = vsyncpa [#allocation4], 0
    // Predicated region
    $region2: #{tpu_custom_call.1} parent=1 // pred_check
      _
    $region3: #{tpu_custom_call.1} parent=1 // pred_check_branch
      %9 = sbr.rel (0) target = $region5
    $region4: #{tpu_custom_call.1} parent=1 // pred_region
      %s11 = ssub.s32 128, 128
      %12 = vsyncadd [#allocation3], %s11
      %s13 = sshll.u32 [#allocation2], 4
      %s14 = int_to_ptr.vmem [resolvable:$true] %s13
      %19 = dma.hbm_to_vmem [thread:$0]  %s0, 128, %s14, [#allocation3], 64, 64, 4
    $region5: #{tpu_custom_call.1} parent=1 // pred_fallthru
      _
    // Predicated region
    $region6: #{tpu_custom_call.1} parent=1 // pred_check
      _
    $region7: #{tpu_custom_call.1} parent=1 // pred_check_branch
      %21 = sbr.rel (0) target = $region9
    $region8: #{tpu_custom_call.1} parent=1 // pred_region
      %22 = dma.done [#allocation3], 128
    $region9: #{tpu_custom_call.1} parent=1 // pred_fallthru
      _
    %s23 = smul.u32 0, 128
    %p24 = scmp.lt.s32.totalorder %s23, 16
    // Predicated region
    $region10: #{tpu_custom_call.1} parent=1 // pred_check
      %p25 = pneg %p24
    $region11: #{tpu_custom_call.1} parent=1 // pred_check_branch
      %27 = sbr.rel (%p25) target = $region13
    $region12: #{tpu_custom_call.1} parent=1 // pred_region
      %v28 = vld [vmem:[#allocation2] sm:$0x1]
      %v29 = vld [vmem:[#allocation2 + $0x4] sm:$0x1]
      %v30 = vld [vmem:[#allocation2 + $0x1] sm:$0x1]
      %v31 = vld [vmem:[#allocation2 + $0x5] sm:$0x1]
      %v32 = vadd.f32 %v28, %v30
      %v33 = vadd.f32 %v29, %v31
      %v34 = vld [vmem:[#allocation2 + $0x2] sm:$0x1]
      %v35 = vld [vmem:[#allocation2 + $0x6] sm:$0x1]
      %v36 = vadd.f32 %v32, %v34
      %v37 = vadd.f32 %v33, %v35
      %v38 = vld [vmem:[#allocation2 + $0x3] sm:$0x1]
      %v39 = vld [vmem:[#allocation2 + $0x7] sm:$0x1]
      %v40 = vadd.f32 %v36, %v38
      %v41 = vadd.f32 %v37, %v39
      %v42 = vmul.f32 %v40, 0.25
      %v43 = vmul.f32 %v41, 0.25
      %v44 = vmax.f32 %v42, -1.0
      %v45 = vmax.f32 %v43, -1.0
      %v46 = vmin.f32 %v44, 1.0
      %v47 = vmin.f32 %v45, 1.0
      %v48 = vlaneseq
      %v49 = vand.u32 %v48, 127
      %v50 = vstv %s23
      %v51 = vadd.s32 %v50, %v49
      %vm52 = vcmp.lt.s32.totalorder %v51, 16
      %v55 = vrot.slane %v47, 7
      %vm56 = vcmask 1041409
      %v57 = vsel %vm56, %v55, %v46
      %v59 = vsel %vm52, %v57, 0.0
      %60 = vst [vmem:[#allocation5] sm:$0x3] %v59
    $region13: #{tpu_custom_call.1} parent=1 // pred_fallthru
      _
    %p61 = scmp.ge.s32.totalorder %s23, 16
    // Predicated region
    $region14: #{tpu_custom_call.1} parent=1 // pred_check
      %p62 = pneg %p61
    $region15: #{tpu_custom_call.1} parent=1 // pred_check_branch
      %64 = sbr.rel (%p62) target = $region17
    $region16: #{tpu_custom_call.1} parent=1 // pred_region
      %65 = vst [vmem:[#allocation5] sm:$0x3] 0.0
    $region17: #{tpu_custom_call.1} parent=1 // pred_fallthru
      _
    // Predicated region
    $region18: #{tpu_custom_call.1} parent=1 // pred_check
      _
    $region19: #{tpu_custom_call.1} parent=1 // pred_check_branch
      %67 = sbr.rel (0) target = $region21
    $region20: #{tpu_custom_call.1} parent=1 // pred_region
      %s69 = ssub.s32 32, 32
      %70 = vsyncadd [#allocation4], %s69
      %s72 = sshll.u32 [#allocation5], 4
      %s73 = int_to_ptr.vmem [resolvable:$true] %s72
      %75 = dma.vmem_to_hbm [thread:$0]  %s73, 32, %s1, [#allocation4]
    $region21: #{tpu_custom_call.1} parent=1 // pred_fallthru
      _
    // Predicated region
    $region22: #{tpu_custom_call.1} parent=1 // pred_check
      _
    $region23: #{tpu_custom_call.1} parent=1 // pred_check_branch
      %77 = sbr.rel (0) target = $region25
    $region24: #{tpu_custom_call.1} parent=1 // pred_region
      %78 = dma.done [#allocation4], 32
    $region25: #{tpu_custom_call.1} parent=1 // pred_fallthru
      _
    %79 = vsyncpa [#allocation3], 1
    %80 = vsyncpa [#allocation4], 1

</llo_original>
